<compile_context>
chip_gen: v7x
topology: tpu7x:2x2x1
jax: 0.10.0
libtpu: 0.0.40
codegen_flags: <defaults>
</compile_context>

<pallas_src>
import jax
import jax.numpy as jnp
from jax import lax
from jax.experimental import pallas as pl
from jax.experimental.pallas import tpu as pltpu

_LOG2E = 1.4426950408889634


def _sdpa_flash_kernel(xq_ref, kp_ref, v_ref, wqT_ref, o_ref,
                       q_sc, m_sc, l_sc, acc_sc):
    kv = pl.program_id(2)

    @pl.when(kv == 0)
    def _init():
        # Project this Q tile once per (batch, q-tile).  W_Q^T already carries
        # log2(e)/sqrt(d_k), so scores below live directly in the base-2
        # exponent domain.  MXU feed dtype == q_sc.dtype (bf16 by default).
        q = jnp.dot(xq_ref[...].astype(q_sc.dtype), wqT_ref[...],
                    preferred_element_type=jnp.float32)
        q_sc[...] = q.astype(q_sc.dtype)
        m_sc[...] = jnp.full(m_sc.shape, -jnp.inf, dtype=jnp.float32)
        l_sc[...] = jnp.zeros(l_sc.shape, dtype=jnp.float32)
        acc_sc[...] = jnp.zeros(acc_sc.shape, dtype=jnp.float32)

    # Scores (log2 domain): contract last dims of q (tq, d_k) and the
    # pre-projected K tile (tk, d_k) -> (tq, tk).  bf16 operands, f32 acc.
    s = lax.dot_general(q_sc[...], kp_ref[...],
                        dimension_numbers=(((1,), (1,)), ((), ())),
                        preferred_element_type=jnp.float32)

    # TODO(synk): optional boolean attn_mask (masked_fill_) not plumbed
    # through; the reference forward is exercised with mask=None.

    # Online (flash) softmax update, base-2.
    m_prev = m_sc[...]
    m_new = jnp.maximum(m_prev, jnp.max(s, axis=-1, keepdims=True))
    alpha = jnp.exp2(m_prev - m_new)
    p = jnp.exp2(s - m_new)
    l_sc[...] = alpha * l_sc[...] + jnp.sum(p, axis=-1, keepdims=True)
    acc_sc[...] = alpha * acc_sc[...] + jnp.dot(
        p.astype(v_ref.dtype), v_ref[...], preferred_element_type=jnp.float32)
    m_sc[...] = m_new

    @pl.when(kv == pl.num_programs(2) - 1)
    def _finalize():
        inv_l = pl.reciprocal(l_sc[...], approx=True)  # EUP slot, ~free
        o_ref[...] = (acc_sc[...] * inv_l).astype(o_ref.dtype)


def _pick_tile(length, pref):
    """Largest divisor of `length` <= pref, preferring multiples of 256 (full
    v6e/v7x MXU), then 128 (v5e MXU), then 8 (sublane)."""
    if length <= pref:
        return length
    for quantum in (256, 128, 8):
        t = (pref // quantum) * quantum
        while t >= quantum:
            if length % t == 0:
                return t
            t -= quantum
    return length


def scaled_dot_product_attention(input_Q, input_K, input_V, W_Q, W_K, d_k,
                                 tq=512, tk=256, mxu_dtype=jnp.bfloat16,
                                 kv_buffering=None):
    """input_Q: (B, len_q, d), input_K/input_V: (B, len_k, d),
    W_Q: (d_q, d), W_K: (d_k, d) (torch.nn.Linear layout). Returns (B, len_q, d).

    mxu_dtype: dtype fed to the MXU (bf16 default; None -> keep input dtype).
    kv_buffering: optional pipeline depth (e.g. 3 on v5e) for the K/V streams.
    """
    B, Lq, D = input_Q.shape
    _, Lk, _ = input_K.shape
    d_q = W_Q.shape[0]
    d_kd = W_K.shape[0]
    assert d_q == d_kd, "scores matmul requires d_q == d_k"

    if mxu_dtype is None:
        mxu_dtype = input_Q.dtype

    # ---- One-time wrapper-side prep (layout plumbing, not per-grid-step) ----
    # 1) Hoist the K projection: otherwise it is recomputed once per q-tile
    #    inside the kernel.  Storing it in the MXU feed dtype also shrinks the
    #    per-q-tile K re-streaming from Lk*D to Lk*d_k (narrower) bytes.
    Kp = jnp.einsum("bkd,fd->bkf", input_K, W_K,
                    preferred_element_type=jnp.float32).astype(mxu_dtype)
    # 2) Pre-transpose W_Q to (d_in, d_out) and fold 1/sqrt(d_k) (temperature)
    #    plus log2(e) into it -> base-2 online softmax, no in-kernel transpose.
    scale = _LOG2E / (float(d_k) ** 0.5)
    WqT = (W_Q.astype(jnp.float32) * scale).T.astype(mxu_dtype)
    # 3) V is consumed by the PV matmul in the MXU feed dtype; casting here
    #    (instead of per-step in-kernel) also halves its HBM re-streaming.
    Vc = input_V.astype(mxu_dtype)

    # ---- Tile selection --------------------------------------------------
    tq = _pick_tile(Lq, tq)
    tk = _pick_tile(Lk, tk)
    # v7x has 2 TensorCores/chip: make sure at least one "parallel" grid axis
    # has extent >= 2 so the second core doesn't idle.
    if B * (Lq // tq) < 2:
        half = _pick_tile(Lq, max(8, tq // 2))
        if half < Lq and Lq % half == 0 and Lq // half >= 2:
            tq = half
    grid = (B, Lq // tq, Lk // tk)
    q_tiles = Lq // tq

    bq = jnp.dtype(input_Q.dtype).itemsize
    bk = jnp.dtype(Kp.dtype).itemsize
    bv = jnp.dtype(Vc.dtype).itemsize
    bm = jnp.dtype(mxu_dtype).itemsize

    # Per-step VMEM estimate (double-buffered inputs/outputs + f32 scratch).
    # Only raise vmem_limit_bytes if we would exceed the 32 MiB scoped default
    # (v7x has 64 MiB/TC physical, so stay modest by default).
    vmem_est = (2 * (tq * D * bq + tk * d_kd * bk + tk * D * bv + tq * D * bq)
                + tq * d_q * bm + 2 * tq * 128 * 4 + tq * D * 4
                + 2 * D * d_q * bm)
    vmem_limit = None
    if vmem_est > 30 * 1024 * 1024:
        vmem_limit = min(int(vmem_est * 2), 100 * 1024 * 1024)

    cost = pl.CostEstimate(
        flops=int(2 * B * (Lq * D * d_q + Lq * Lk * d_q + Lq * Lk * D)),
        transcendentals=int(B * Lq * Lk),
        bytes_accessed=int(2 * B * Lq * D * bq                      # xq in + out
                           + q_tiles * B * Lk * (d_kd * bk + D * bv)  # K/V restream
                           + D * d_q * bm),
    )

    kv_pipe = {} if kv_buffering is None else dict(
        pipeline_mode=pl.Buffered(kv_buffering))

    return pl.pallas_call(
        _sdpa_flash_kernel,
        out_shape=jax.ShapeDtypeStruct((B, Lq, D), input_Q.dtype),
        grid_spec=pltpu.PrefetchScalarGridSpec(
            num_scalar_prefetch=0,
            grid=grid,
            in_specs=[
                # None (squeezed) leading batch dim -> 2-D, lane-dense refs.
                pl.BlockSpec((None, tq, D), lambda b, qi, ki: (b, qi, 0)),
                pl.BlockSpec((None, tk, d_kd),
                             lambda b, qi, ki: (b, ki, 0), **kv_pipe),
                pl.BlockSpec((None, tk, D),
                             lambda b, qi, ki: (b, ki, 0), **kv_pipe),
                pl.BlockSpec((D, d_q), lambda b, qi, ki: (0, 0)),
            ],
            out_specs=pl.BlockSpec((None, tq, D), lambda b, qi, ki: (b, qi, 0)),
            scratch_shapes=[
                pltpu.VMEM((tq, d_q), mxu_dtype),     # projected Q tile
                pltpu.VMEM((tq, 1), jnp.float32),     # running max  m (log2)
                pltpu.VMEM((tq, 1), jnp.float32),     # running sum  l
                pltpu.VMEM((tq, D), jnp.float32),     # output accumulator
            ],
        ),
        compiler_params=pltpu.CompilerParams(
            dimension_semantics=("parallel", "parallel", "arbitrary"),
            vmem_limit_bytes=vmem_limit,
        ),
        cost_estimate=cost,
    )(input_Q, Kp, Vc, WqT)


def _reference(input_Q, input_K, input_V, W_Q, W_K, d_k):
    Q = input_Q @ W_Q.T
    K = input_K @ W_K.T
    scores = jnp.einsum("bqe,bke->bqk", Q, K) / jnp.sqrt(jnp.float32(d_k))
    attn = jax.nn.softmax(scores, axis=-1)
    return jnp.einsum("bqk,bkd->bqd", attn, input_V)


def _run_case(key, B, Lq, Lk, D, d_q, d_k, atol=1e-2, rtol=2e-2, **kwargs):
    kq, kk, kv, kwq, kwk = jax.random.split(key, 5)
    input_Q = jax.random.normal(kq, (B, Lq, D), dtype=jnp.float32)
    input_K = jax.random.normal(kk, (B, Lk, D), dtype=jnp.float32)
    input_V = jax.random.normal(kv, (B, Lk, D), dtype=jnp.float32)
    bound = 1.0 / (D ** 0.5)   # torch.nn.Linear default init range
    W_Q = jax.random.uniform(kwq, (d_q, D), jnp.float32, -bound, bound)
    W_K = jax.random.uniform(kwk, (d_k, D), jnp.float32, -bound, bound)

    out = scaled_dot_product_attention(input_Q, input_K, input_V, W_Q, W_K,
                                       d_k, **kwargs)
    out = jax.block_until_ready(out)
    ref = _reference(input_Q, input_K, input_V, W_Q, W_K, d_k)
    assert out.shape == (B, Lq, D)
    # Tolerance accounts for bf16 MXU feeding (scores / PV matmuls).
    assert jnp.allclose(out, ref, atol=atol, rtol=rtol), (
        float(jnp.max(jnp.abs(out - ref))))


if __name__ == "__main__":
    key = jax.random.PRNGKey(0)
    k1, k2 = jax.random.split(key)

    # Small shapes consistent with the module's forward:
    #   batch=2, len_q=len_k=8, d=32, d_q=d_k=16
    _run_case(k1, B=2, Lq=8, Lk=8, D=32, d_q=16, d_k=16)

    # Flash-tiling case: multi q-tile and kv-tile grid, 256-aligned kv tile.
    _run_case(k2, B=2, Lq=256, Lk=512, D=128, d_q=128, d_k=128,
              tq=128, tk=256)

    print("KERNEL_OK")
</pallas_src>

<mosaic_0001>
module attributes {stable_mosaic.version = 11 : i64} {
  func.func @_sdpa_flash_kernel(%arg0: i32, %arg1: i32, %arg2: i32, %arg3: memref<1x8x32xf32, #tpu.memory_space<vmem>>, %arg4: memref<1x8x16xbf16, #tpu.memory_space<vmem>>, %arg5: memref<1x8x32xbf16, #tpu.memory_space<vmem>>, %arg6: memref<32x16xbf16, #tpu.memory_space<vmem>>, %arg7: memref<1x8x32xf32, #tpu.memory_space<vmem>>, %arg8: memref<8x16xbf16, #tpu.memory_space<vmem>>, %arg9: memref<8x1xf32, #tpu.memory_space<vmem>>, %arg10: memref<8x1xf32, #tpu.memory_space<vmem>>, %arg11: memref<8x32xf32, #tpu.memory_space<vmem>>) attributes {dimension_semantics = [#tpu.dimension_semantics<parallel>, #tpu.dimension_semantics<parallel>, #tpu.dimension_semantics<arbitrary>], iteration_bounds = array<i64: 2, 1, 1>, scalar_prefetch = 0 : i64, scratch_operands = 4 : i64, tpu.core_type = #tpu.core_type<tc>, window_params = [{transform_indices = @transform_0, window_bounds = array<i64: 1, 8, 32>}, {transform_indices = @transform_1, window_bounds = array<i64: 1, 8, 16>}, {transform_indices = @transform_2, window_bounds = array<i64: 1, 8, 32>}, {pipeline_mode = #tpu.pipeline_mode<synchronous>, transform_indices = @transform_3, window_bounds = array<i64: 32, 16>}, {transform_indices = @transform_4, window_bounds = array<i64: 1, 8, 32>}]} {
    %c0_i32 = arith.constant 0 : i32
    %0 = arith.cmpi eq, %arg2, %c0_i32 : i32
    %1 = arith.extui %0 : i1 to i32
    %c0_i32_0 = arith.constant 0 : i32
    %2 = arith.cmpi ne, %1, %c0_i32_0 : i32
    scf.if %2 {
      %c0_25 = arith.constant 0 : index
      %c0_26 = arith.constant 0 : index
      %c0_27 = arith.constant 0 : index
      %35 = vector.load %arg3[%c0_25, %c0_26, %c0_27] : memref<1x8x32xf32, #tpu.memory_space<vmem>>, vector<1x8x32xf32>
      %36 = vector.shape_cast %35 : vector<1x8x32xf32> to vector<8x32xf32>
      %37 = arith.truncf %36 : vector<8x32xf32> to vector<8x32xbf16>
      %c0_28 = arith.constant 0 : index
      %c0_29 = arith.constant 0 : index
      %38 = vector.load %arg6[%c0_28, %c0_29] : memref<32x16xbf16, #tpu.memory_space<vmem>>, vector<32x16xbf16>
      %cst_30 = arith.constant dense<0.000000e+00> : vector<8x16xf32>
      %39 = tpu.matmul %37, %38, %cst_30 {dimension_numbers = #tpu.dot_dimension_numbers<[1], [0], [0], [1], [0, 0, 1, 1], [], []>} : vector<8x32xbf16>, vector<32x16xbf16>, vector<8x16xf32> -> vector<8x16xf32>
      %40 = arith.truncf %39 : vector<8x16xf32> to vector<8x16xbf16>
      %c0_31 = arith.constant 0 : index
      %c0_32 = arith.constant 0 : index
      %41 = vector.load %arg8[%c0_31, %c0_32] : memref<8x16xbf16, #tpu.memory_space<vmem>>, vector<8x16xbf16>
      tpu.vector_store %arg8[%c0_31, %c0_32], %40 {strides = array<i32>} : memref<8x16xbf16, #tpu.memory_space<vmem>>, vector<8x16xbf16>,
      %cst_33 = arith.constant 0xFF800000 : f32
      %42 = vector.broadcast %cst_33 : f32 to vector<8x1xf32>
      %c0_34 = arith.constant 0 : index
      %c0_35 = arith.constant 0 : index
      %43 = vector.load %arg9[%c0_34, %c0_35] : memref<8x1xf32, #tpu.memory_space<vmem>>, vector<8x1xf32>
      tpu.vector_store %arg9[%c0_34, %c0_35], %42 {strides = array<i32>} : memref<8x1xf32, #tpu.memory_space<vmem>>, vector<8x1xf32>,
      %cst_36 = arith.constant 0.000000e+00 : f32
      %44 = vector.broadcast %cst_36 : f32 to vector<8x1xf32>
      %c0_37 = arith.constant 0 : index
      %c0_38 = arith.constant 0 : index
      %45 = vector.load %arg10[%c0_37, %c0_38] : memref<8x1xf32, #tpu.memory_space<vmem>>, vector<8x1xf32>
      tpu.vector_store %arg10[%c0_37, %c0_38], %44 {strides = array<i32>} : memref<8x1xf32, #tpu.memory_space<vmem>>, vector<8x1xf32>,
      %cst_39 = arith.constant 0.000000e+00 : f32
      %46 = vector.broadcast %cst_39 : f32 to vector<8x32xf32>
      %c0_40 = arith.constant 0 : index
      %c0_41 = arith.constant 0 : index
      %47 = vector.load %arg11[%c0_40, %c0_41] : memref<8x32xf32, #tpu.memory_space<vmem>>, vector<8x32xf32>
      tpu.vector_store %arg11[%c0_40, %c0_41], %46 {strides = array<i32>} : memref<8x32xf32, #tpu.memory_space<vmem>>, vector<8x32xf32>,
    } else {
    }
    %c0 = arith.constant 0 : index
    %c0_1 = arith.constant 0 : index
    %3 = vector.load %arg8[%c0, %c0_1] : memref<8x16xbf16, #tpu.memory_space<vmem>>, vector<8x16xbf16>
    %c0_2 = arith.constant 0 : index
    %c0_3 = arith.constant 0 : index
    %c0_4 = arith.constant 0 : index
    %4 = vector.load %arg4[%c0_2, %c0_3, %c0_4] : memref<1x8x16xbf16, #tpu.memory_space<vmem>>, vector<1x8x16xbf16>
    %5 = vector.shape_cast %4 : vector<1x8x16xbf16> to vector<8x16xbf16>
    %cst = arith.constant dense<0.000000e+00> : vector<8x8xf32>
    %6 = tpu.matmul %3, %5, %cst {dimension_numbers = #tpu.dot_dimension_numbers<[1], [1], [0], [0], [0, 0, 1, 0], [], []>} : vector<8x16xbf16>, vector<8x16xbf16>, vector<8x8xf32> -> vector<8x8xf32>
    %c0_5 = arith.constant 0 : index
    %c0_6 = arith.constant 0 : index
    %7 = vector.load %arg9[%c0_5, %c0_6] : memref<8x1xf32, #tpu.memory_space<vmem>>, vector<8x1xf32>
    %cst_7 = arith.constant dense<0xFF800000> : vector<8xf32>
    %8 = vector.multi_reduction <maximumf>, %6, %cst_7 [1] : vector<8x8xf32> to vector<8xf32>
    %9 = vector.shape_cast %8 : vector<8xf32> to vector<8x1xf32>
    %10 = arith.maximumf %7, %9 : vector<8x1xf32>
    %11 = arith.subf %7, %10 : vector<8x1xf32>
    %12 = math.exp2 %11 : vector<8x1xf32>
    %13 = vector.broadcast %10 : vector<8x1xf32> to vector<8x8xf32>
    %14 = arith.subf %6, %13 : vector<8x8xf32>
    %15 = math.exp2 %14 : vector<8x8xf32>
    %c0_8 = arith.constant 0 : index
    %c0_9 = arith.constant 0 : index
    %16 = vector.load %arg10[%c0_8, %c0_9] : memref<8x1xf32, #tpu.memory_space<vmem>>, vector<8x1xf32>
    %17 = arith.mulf %12, %16 : vector<8x1xf32>
    %cst_10 = arith.constant dense<0.000000e+00> : vector<8xf32>
    %18 = vector.multi_reduction <add>, %15, %cst_10 [1] : vector<8x8xf32> to vector<8xf32>
    %19 = vector.shape_cast %18 : vector<8xf32> to vector<8x1xf32>
    %20 = arith.addf %17, %19 : vector<8x1xf32>
    %c0_11 = arith.constant 0 : index
    %c0_12 = arith.constant 0 : index
    %21 = vector.load %arg10[%c0_11, %c0_12] : memref<8x1xf32, #tpu.memory_space<vmem>>, vector<8x1xf32>
    tpu.vector_store %arg10[%c0_11, %c0_12], %20 {strides = array<i32>} : memref<8x1xf32, #tpu.memory_space<vmem>>, vector<8x1xf32>,
    %c0_13 = arith.constant 0 : index
    %c0_14 = arith.constant 0 : index
    %22 = vector.load %arg11[%c0_13, %c0_14] : memref<8x32xf32, #tpu.memory_space<vmem>>, vector<8x32xf32>
    %23 = vector.broadcast %12 : vector<8x1xf32> to vector<8x32xf32>
    %24 = arith.mulf %23, %22 : vector<8x32xf32>
    %25 = arith.truncf %15 : vector<8x8xf32> to vector<8x8xbf16>
    %c0_15 = arith.constant 0 : index
    %c0_16 = arith.constant 0 : index
    %c0_17 = arith.constant 0 : index
    %26 = vector.load %arg5[%c0_15, %c0_16, %c0_17] : memref<1x8x32xbf16, #tpu.memory_space<vmem>>, vector<1x8x32xbf16>
    %27 = vector.shape_cast %26 : vector<1x8x32xbf16> to vector<8x32xbf16>
    %cst_18 = arith.constant dense<0.000000e+00> : vector<8x32xf32>
    %28 = tpu.matmul %25, %27, %cst_18 {dimension_numbers = #tpu.dot_dimension_numbers<[1], [0], [0], [1], [0, 0, 1, 1], [], []>} : vector<8x8xbf16>, vector<8x32xbf16>, vector<8x32xf32> -> vector<8x32xf32>
    %29 = arith.addf %24, %28 : vector<8x32xf32>
    %c0_19 = arith.constant 0 : index
    %c0_20 = arith.constant 0 : index
    %30 = vector.load %arg11[%c0_19, %c0_20] : memref<8x32xf32, #tpu.memory_space<vmem>>, vector<8x32xf32>
    tpu.vector_store %arg11[%c0_19, %c0_20], %29 {strides = array<i32>} : memref<8x32xf32, #tpu.memory_space<vmem>>, vector<8x32xf32>,
    %c0_21 = arith.constant 0 : index
    %c0_22 = arith.constant 0 : index
    %31 = vector.load %arg9[%c0_21, %c0_22] : memref<8x1xf32, #tpu.memory_space<vmem>>, vector<8x1xf32>
    tpu.vector_store %arg9[%c0_21, %c0_22], %10 {strides = array<i32>} : memref<8x1xf32, #tpu.memory_space<vmem>>, vector<8x1xf32>,
    %c0_i32_23 = arith.constant 0 : i32
    %32 = arith.cmpi eq, %arg2, %c0_i32_23 : i32
    %33 = arith.extui %32 : i1 to i32
    %c0_i32_24 = arith.constant 0 : i32
    %34 = arith.cmpi ne, %33, %c0_i32_24 : i32
    scf.if %34 {
      %c0_25 = arith.constant 0 : index
      %c0_26 = arith.constant 0 : index
      %35 = vector.load %arg10[%c0_25, %c0_26] : memref<8x1xf32, #tpu.memory_space<vmem>>, vector<8x1xf32>
      %36 = tpu.reciprocal %35 {approx = true} : vector<8x1xf32> -> vector<8x1xf32>
      %c0_27 = arith.constant 0 : index
      %c0_28 = arith.constant 0 : index
      %37 = vector.load %arg11[%c0_27, %c0_28] : memref<8x32xf32, #tpu.memory_space<vmem>>, vector<8x32xf32>
      %38 = vector.broadcast %36 : vector<8x1xf32> to vector<8x32xf32>
      %39 = arith.mulf %37, %38 : vector<8x32xf32>
      %c0_29 = arith.constant 0 : index
      %c0_30 = arith.constant 0 : index
      %c0_31 = arith.constant 0 : index
      %40 = vector.load %arg7[%c0_29, %c0_30, %c0_31] : memref<1x8x32xf32, #tpu.memory_space<vmem>>, vector<1x8x32xf32>
      %41 = vector.shape_cast %40 : vector<1x8x32xf32> to vector<8x32xf32>
      %42 = vector.shape_cast %39 : vector<8x32xf32> to vector<1x8x32xf32>
      tpu.vector_store %arg7[%c0_29, %c0_30, %c0_31], %42 {strides = array<i32>} : memref<1x8x32xf32, #tpu.memory_space<vmem>>, vector<1x8x32xf32>,
    } else {
    }
    return
  }
  func.func @transform_0(%arg0: i32, %arg1: i32, %arg2: i32) -> (i32, i32, i32) {
    %c0_i32 = arith.constant 0 : i32
    %c0_i32_0 = arith.constant 0 : i32
    return %arg0, %arg1, %c0_i32 : i32, i32, i32
  }
  func.func @transform_1(%arg0: i32, %arg1: i32, %arg2: i32) -> (i32, i32, i32) {
    %c0_i32 = arith.constant 0 : i32
    %c0_i32_0 = arith.constant 0 : i32
    return %arg0, %arg2, %c0_i32 : i32, i32, i32
  }
  func.func @transform_2(%arg0: i32, %arg1: i32, %arg2: i32) -> (i32, i32, i32) {
    %c0_i32 = arith.constant 0 : i32
    %c0_i32_0 = arith.constant 0 : i32
    return %arg0, %arg2, %c0_i32 : i32, i32, i32
  }
  func.func @transform_3(%arg0: i32, %arg1: i32, %arg2: i32) -> (i32, i32) {
    %c0_i32 = arith.constant 0 : i32
    %c0_i32_0 = arith.constant 0 : i32
    %c0_i32_1 = arith.constant 0 : i32
    return %c0_i32, %c0_i32_0 : i32, i32
  }
  func.func @transform_4(%arg0: i32, %arg1: i32, %arg2: i32) -> (i32, i32, i32) {
    %c0_i32 = arith.constant 0 : i32
    %c0_i32_0 = arith.constant 0 : i32
    return %arg0, %arg1, %c0_i32 : i32, i32, i32
  }
}

</mosaic_0001>

<llo_original>
// kernel: tpu_custom_call.1
$region0: #{tpu_custom_call.1}
  #allocation0 [shape = 'u32[]', space=smem, size = 0x4, offset = 0x4, fixed_abs, tag = 'smem constant byte address 0x4 - core index']
  #allocation1 [shape = 'u32[144,128]{1,0:T(1,128)}', space=vmem, size = 0x12000, scoped, tag = 'internal scratch']
  #allocation2 [shape = 'bf16[8,16]{1,0:T(8,128)(2,1)}', space=vmem, size = 0x800, scoped, tag = 'scratch operand']
  #allocation3 [shape = 'f32[8,1]{1,0:T(8,128)}', space=vmem, size = 0x1000, scoped, tag = 'scratch operand']
  #allocation4 [shape = 'f32[8,1]{1,0:T(8,128)}', space=vmem, size = 0x1000, scoped, tag = 'scratch operand']
  #allocation5 [shape = 'f32[8,32]{1,0:T(8,128)}', space=vmem, size = 0x1000, scoped, tag = 'scratch operand']
  %s0 = inlined_call_operand.vmem [shape: f32[2,8,32], index: 0, kind: input, shape index: {}]
  %s1 = inlined_call_operand.vmem [shape: bf16[2,8,16], index: 1, kind: input, shape index: {}]
  %s2 = inlined_call_operand.hbm [shape: bf16[2,8,32], index: 2, kind: input, shape index: {}]
  %s3 = inlined_call_operand.vmem [shape: bf16[32,16], index: 3, kind: input, shape index: {}]
  %s4 = inlined_call_operand.hbm [shape: f32[2,8,32], index: 4, kind: output, shape index: {}]
  %s5 = sld [smem:[#allocation0]]
  $region61: #{tpu_custom_call.1} parent=0
    _
  %s7 = ssub.s32 1, %s5
  %s8 = scalar_select 0, %s7, %s5
  $region1: #{tpu_custom_call.1} parent=0
    #allocation6 [shape = 'u8[4096]{0}', space=vmem, size = 0x1000, scoped, tag = 'input window, operand 2']
    #allocation7 [shape = 's32[2]{0}', space=sflag, size = 0x8, scoped, tag = 'scoped memory for tpu_custom_call.1']
    #allocation8 [shape = 's32[2]{0}', space=sflag, size = 0x8, scoped, tag = 'scoped memory for tpu_custom_call.1']
    #allocation9 [shape = 'u8[8192]{0}', space=vmem, size = 0x2000, scoped, tag = 'output window, operand 0']
    %9 = vsyncpa [#allocation7], 0
    %s10 = scalar_lea.sflag [#allocation7], 1
    %11 = vsyncpa %s10, 0
    %12 = vsyncpa [#allocation8], 0
    %s13 = scalar_lea.sflag [#allocation8], 1
    %14 = vsyncpa %s13, 0
    loop: start=0, step=1, limit=4
    $region2: #{tpu_custom_call.1} parent=1 // loop_pre_header
      _
    $region3: #{tpu_custom_call.1} parent=1 // loop_header
      %s16 = sphi 0, %s20
      %p17 = scmp.ge.s32.totalorder %s16, 4
      %s23 = sphi 0, %s42
      %s24 = sphi 0, %s38
      %s25 = sphi 0, %s34
      %s26 = sphi 0, %s23
      %s27 = sphi 0, %s24
      %s28 = sphi 0, %s25
      %s29 = sphi 0, %s26
      %s30 = sphi 0, %s27
      %s31 = sphi 0, %s28
      %s47 = sphi 0, %s49
      %s50 = sphi 0, %s47
      %s51 = sphi 0, %s50
      %s67 = sphi 0, %s51
      %s75 = sphi 0, %s77
      %s78 = sphi 0, %s75
      %s79 = sphi 0, %s78
      %s95 = sphi 0, %s79
      %s103 = sphi 0, %s105
      %s106 = sphi 0, %s103
      %s107 = sphi 0, %s106
      %s123 = sphi 0, %s107
      %s127 = sphi 0, %s127
      %s129 = sphi 0, %s127
      %s130 = sphi 0, %s129
      %s144 = sphi 0, %s130
      %s152 = sphi 0, %s154
      %s155 = sphi 0, %s152
      %s156 = sphi 0, %s155
      %s172 = sphi 0, %s156
    $region4: #{tpu_custom_call.1} parent=1 // loop_header_branch
      %19 = sbr.rel (%p17) target = $region8
    $region5: #{tpu_custom_call.1} parent=1 // loop_body
      %s21 = ssub.s32 %s16, 1
      %s22 = ssub.s32 %s16, 2
      %s32 = sadd.s32 1, %s25
      %p33 = scmp.ge.s32.totalorder %s32, 1
      %s34 = scalar_select %p33, 0, %s32
      %s35 = sadd.s32 1, %s24
      %s36 = scalar_select %p33, %s35, %s24
      %p37 = scmp.ge.s32.totalorder %s36, 1
      %s38 = scalar_select %p37, 0, %s36
      %s39 = sadd.s32 1, %s23
      %s40 = scalar_select %p37, %s39, %s23
      %p41 = scmp.ge.s32.totalorder %s40, 2
      %s42 = scalar_select %p41, 0, %s40
      %s43 = ssub.s32 %s23, %s42
      %s44 = ssub.s32 %s24, %s38
      %s45 = sor.u32 %s43, %s44
      %p46 = scmp.eq.s32.totalorder %s45, 0
      %s48 = sadd.s32 %s47, 1
      %s49 = scalar_select %p46, %s47, %s48
      %p52 = pneg %p46
      %p53 = scmp.eq.s32.totalorder %s16, 1
      %p54 = por %p52, %p53
      %p55 = scmp.ne.s32.totalorder %s47, %s50
      %p56 = scmp.eq.s32.totalorder %s16, 0
      %p57 = por %p55, %p56
      %p58 = scmp.ne.s32.totalorder %s47, %s50
      %p59 = scmp.eq.s32.totalorder %s21, 1
      %p60 = por %p58, %p59
      %p61 = scmp.ne.s32.totalorder %s50, %s51
      %p62 = scmp.eq.s32.totalorder %s21, 0
      %p63 = por %p61, %p62
      %p64 = scmp.ne.s32.totalorder %s50, %s51
      %p65 = scmp.eq.s32.totalorder %s22, 1
      %p66 = por %p64, %p65
      %p68 = scmp.ne.s32.totalorder %s51, %s67
      %p69 = scmp.eq.s32.totalorder %s22, 0
      %p70 = por %p68, %p69
      %s71 = ssub.s32 %s23, %s42
      %s72 = ssub.s32 %s25, %s34
      %s73 = sor.u32 %s71, %s72
      %p74 = scmp.eq.s32.totalorder %s73, 0
      %s76 = sadd.s32 %s75, 1
      %s77 = scalar_select %p74, %s75, %s76
      %p80 = pneg %p74
      %p81 = scmp.eq.s32.totalorder %s16, 1
      %p82 = por %p80, %p81
      %p83 = scmp.ne.s32.totalorder %s75, %s78
      %p84 = scmp.eq.s32.totalorder %s16, 0
      %p85 = por %p83, %p84
      %p86 = scmp.ne.s32.totalorder %s75, %s78
      %p87 = scmp.eq.s32.totalorder %s21, 1
      %p88 = por %p86, %p87
      %p89 = scmp.ne.s32.totalorder %s78, %s79
      %p90 = scmp.eq.s32.totalorder %s21, 0
      %p91 = por %p89, %p90
      %p92 = scmp.ne.s32.totalorder %s78, %s79
      %p93 = scmp.eq.s32.totalorder %s22, 1
      %p94 = por %p92, %p93
      %p96 = scmp.ne.s32.totalorder %s79, %s95
      %p97 = scmp.eq.s32.totalorder %s22, 0
      %p98 = por %p96, %p97
      %s99 = ssub.s32 %s23, %s42
      %s100 = ssub.s32 %s25, %s34
      %s101 = sor.u32 %s99, %s100
      %p102 = scmp.eq.s32.totalorder %s101, 0
      %s104 = sadd.s32 %s103, 1
      %s105 = scalar_select %p102, %s103, %s104
      %p108 = pneg %p102
      %p109 = scmp.eq.s32.totalorder %s16, 1
      %p110 = por %p108, %p109
      %p111 = scmp.ne.s32.totalorder %s103, %s106
      %p112 = scmp.eq.s32.totalorder %s16, 0
      %p113 = por %p111, %p112
      %p114 = scmp.ne.s32.totalorder %s103, %s106
      %p115 = scmp.eq.s32.totalorder %s21, 1
      %p116 = por %p114, %p115
      %p117 = scmp.ne.s32.totalorder %s106, %s107
      %p118 = scmp.eq.s32.totalorder %s21, 0
      %p119 = por %p117, %p118
      %p120 = scmp.ne.s32.totalorder %s106, %s107
      %p121 = scmp.eq.s32.totalorder %s22, 1
      %p122 = por %p120, %p121
      %p124 = scmp.ne.s32.totalorder %s107, %s123
      %p125 = scmp.eq.s32.totalorder %s22, 0
      %p126 = por %p124, %p125
      %s128 = sadd.s32 %s127, 1
      %p131 = scmp.eq.s32.totalorder %s16, 1
      %p132 = scmp.ne.s32.totalorder %s127, %s129
      %p133 = scmp.eq.s32.totalorder %s16, 0
      %p134 = por %p132, %p133
      %p135 = scmp.ne.s32.totalorder %s127, %s129
      %p136 = scmp.eq.s32.totalorder %s21, 1
      %p137 = por %p135, %p136
      %p138 = scmp.ne.s32.totalorder %s129, %s130
      %p139 = scmp.eq.s32.totalorder %s21, 0
      %p140 = por %p138, %p139
      %p141 = scmp.ne.s32.totalorder %s129, %s130
      %p142 = scmp.eq.s32.totalorder %s22, 1
      %p143 = por %p141, %p142
      %p145 = scmp.ne.s32.totalorder %s130, %s144
      %p146 = scmp.eq.s32.totalorder %s22, 0
      %p147 = por %p145, %p146
      %s148 = ssub.s32 %s23, %s42
      %s149 = ssub.s32 %s24, %s38
      %s150 = sor.u32 %s148, %s149
      %p151 = scmp.eq.s32.totalorder %s150, 0
      %s153 = sadd.s32 %s152, 1
      %s154 = scalar_select %p151, %s152, %s153
      %p157 = pneg %p151
      %p158 = scmp.eq.s32.totalorder %s16, 1
      %p159 = por %p157, %p158
      %p160 = scmp.ne.s32.totalorder %s152, %s155
      %p161 = scmp.eq.s32.totalorder %s16, 0
      %p162 = por %p160, %p161
      %p163 = scmp.ne.s32.totalorder %s152, %s155
      %p164 = scmp.eq.s32.totalorder %s21, 1
      %p165 = por %p163, %p164
      %p166 = scmp.ne.s32.totalorder %s155, %s156
      %p167 = scmp.eq.s32.totalorder %s21, 0
      %p168 = por %p166, %p167
      %p169 = scmp.ne.s32.totalorder %s155, %s156
      %p170 = scmp.eq.s32.totalorder %s22, 1
      %p171 = por %p169, %p170
      %p173 = scmp.ne.s32.totalorder %s156, %s172
      %p174 = scmp.eq.s32.totalorder %s22, 0
      %p175 = por %p173, %p174
      %p176 = scmp.le.s32.totalorder 1, %s16
      %p177 = scmp.lt.s32.totalorder %s16, 3
      %p178 = pnand %p176, %p177
      %p179 = pneg %p178
      // Predicated region
      $region9: #{tpu_custom_call.1} parent=5 // pred_check
        _
      $region10: #{tpu_custom_call.1} parent=5 // pred_check_branch
        %181 = sbr.rel (%p178) target = $region12
      $region11: #{tpu_custom_call.1} parent=5 // pred_region
        %s182 = ssub.s32 %s16, 1
        // Predicated region
        $region13: #{tpu_custom_call.1} parent=11 // pred_check
          %p183 = pneg %p140
        $region14: #{tpu_custom_call.1} parent=11 // pred_check_branch
          %185 = sbr.rel (%p183) target = $region16
        $region15: #{tpu_custom_call.1} parent=11 // pred_region
          _
        $region16: #{tpu_custom_call.1} parent=11 // pred_fallthru
          _
      $region12: #{tpu_custom_call.1} parent=5 // pred_fallthru
        _
      %p186 = scmp.lt.s32.totalorder %s16, 2
      // Predicated region
      $region17: #{tpu_custom_call.1} parent=5 // pred_check
        %p187 = pneg %p186
      $region18: #{tpu_custom_call.1} parent=5 // pred_check_branch
        %189 = sbr.rel (%p187) target = $region20
      $region19: #{tpu_custom_call.1} parent=5 // pred_region
        // Predicated region
        $region21: #{tpu_custom_call.1} parent=19 // pred_check
          %p190 = pneg %p57
        $region22: #{tpu_custom_call.1} parent=19 // pred_check_branch
          %192 = sbr.rel (%p190) target = $region24
        $region23: #{tpu_custom_call.1} parent=19 // pred_region
          %p193 = scmp.lt.s32.totalorder %s23, 1
          %s194 = scalar_select %p193, %s23, 1
          %p195 = scmp.lt.s32.totalorder %s24, 0
          %s196 = scalar_select %p195, %s24, 0
          %s197 = sadd.s32 %s196, %s194
          %s198 = smul.addr %s197, 8
          %s199 = scalar_lea.vmem %s0, %s198
        $region24: #{tpu_custom_call.1} parent=19 // pred_fallthru
          _
        // Predicated region
        $region25: #{tpu_custom_call.1} parent=19 // pred_check
          %p200 = pneg %p85
        $region26: #{tpu_custom_call.1} parent=19 // pred_check_branch
          %202 = sbr.rel (%p200) target = $region28
        $region27: #{tpu_custom_call.1} parent=19 // pred_region
          %p203 = scmp.lt.s32.totalorder %s23, 1
          %s204 = scalar_select %p203, %s23, 1
          %p205 = scmp.lt.s32.totalorder %s25, 0
          %s206 = scalar_select %p205, %s25, 0
          %s207 = sadd.s32 %s206, %s204
          %s208 = smul.addr %s207, 4
          %s209 = scalar_lea.vmem %s1, %s208
        $region28: #{tpu_custom_call.1} parent=19 // pred_fallthru
          _
        // Predicated region
        $region29: #{tpu_custom_call.1} parent=19 // pred_check
          %p210 = pneg %p113
        $region30: #{tpu_custom_call.1} parent=19 // pred_check_branch
          %212 = sbr.rel (%p210) target = $region32
        $region31: #{tpu_custom_call.1} parent=19 // pred_region
          %s213 = sand.u32 %s103, 1
          %s214 = scalar_lea.sflag [#allocation7], %s213
          %s215 = sand.u32 %s103, 1
          %s216 = smul.addr %s215, 4
          %s217 = scalar_lea.vmem [#allocation6], %s216
          %s219 = ssub.s32 64, 64
          %220 = vsyncadd %s214, %s219
          %s221 = sadd.s32 %s25, %s23
          %s222 = smul.addr %s221, 64
          %s223 = scalar_lea.hbm %s2, %s222
          %s225 = sshll.u32 %s217, 4
          %s226 = int_to_ptr.vmem [resolvable:$true] %s225
          %228 = dma.hbm_to_vmem [thread:$0]  %s223, 64, %s226, %s214
        $region32: #{tpu_custom_call.1} parent=19 // pred_fallthru
          _
      $region20: #{tpu_custom_call.1} parent=5 // pred_fallthru
        _
      %p229 = scmp.le.s32.totalorder 1, %s16
      %p230 = scmp.lt.s32.totalorder %s16, 3
      %p231 = pnand %p229, %p230
      %p232 = pneg %p231
      // Predicated region
      $region33: #{tpu_custom_call.1} parent=5 // pred_check
        _
      $region34: #{tpu_custom_call.1} parent=5 // pred_check_branch
        %234 = sbr.rel (%p231) target = $region36
      $region35: #{tpu_custom_call.1} parent=5 // pred_region
        %s235 = ssub.s32 %s16, 1
        %s236 = sand.u32 %s106, 1
        %s237 = scalar_lea.sflag [#allocation7], %s236
        %s238 = sand.u32 %s106, 1
        %s239 = smul.addr %s238, 4
        %s240 = scalar_lea.vmem [#allocation6], %s239
        // Predicated region
        $region37: #{tpu_custom_call.1} parent=35 // pred_check
          %p241 = pneg %p119
        $region38: #{tpu_custom_call.1} parent=35 // pred_check_branch
          %243 = sbr.rel (%p241) target = $region40
        $region39: #{tpu_custom_call.1} parent=35 // pred_region
          %244 = dma.done %s237, 64
        $region40: #{tpu_custom_call.1} parent=35 // pred_fallthru
          _
        %p245 = scmp.lt.s32.totalorder %s26, 1
        %s246 = scalar_select %p245, %s26, 1
        %p247 = scmp.lt.s32.totalorder %s27, 0
        %s248 = scalar_select %p247, %s27, 0
        %s249 = sadd.s32 %s248, %s246
        %s250 = smul.addr %s249, 8
        %s251 = scalar_lea.vmem %s0, %s250
        %p252 = pneg %p63
        %p253 = pneg %p60
        %p254 = scmp.lt.s32.totalorder %s26, 1
        %s255 = scalar_select %p254, %s26, 1
        %p256 = scmp.lt.s32.totalorder %s28, 0
        %s257 = scalar_select %p256, %s28, 0
        %s258 = sadd.s32 %s257, %s255
        %s259 = smul.addr %s258, 4
        %s260 = scalar_lea.vmem %s1, %s259
        %p261 = pneg %p91
        %p262 = pneg %p88
        %s263 = sand.u32 %s106, 1
        %s264 = scalar_lea.sflag [#allocation7], %s263
        %s265 = sand.u32 %s106, 1
        %s266 = smul.addr %s265, 4
        %s267 = scalar_lea.vmem [#allocation6], %s266
        %p268 = pneg %p119
        %p269 = pneg %p116
        %p270 = pneg %p140
        %p271 = pneg %p137
        %p272 = pneg %p168
        %p273 = pneg %p165
        %s274 = sand.u32 %s155, 1
        %s275 = scalar_lea.sflag [#allocation8], %s274
        %s276 = sand.u32 %s155, 1
        %s277 = smul.addr %s276, 8
        %s278 = scalar_lea.vmem [#allocation9], %s277
        %p279 = scmp.lt.s32.totalorder %s26, 1
        %s280 = scalar_select %p279, %s26, 1
        %p281 = scmp.lt.s32.totalorder %s27, 0
        %s282 = scalar_select %p281, %s27, 0
        %s283 = sadd.s32 %s282, %s280
        %s284 = smul.addr %s283, 8
        %s285 = scalar_lea.vmem %s0, %s284
        %p286 = scmp.lt.s32.totalorder %s26, 1
        %s287 = scalar_select %p286, %s26, 1
        %p288 = scmp.lt.s32.totalorder %s28, 0
        %s289 = scalar_select %p288, %s28, 0
        %s290 = sadd.s32 %s289, %s287
        %s291 = smul.addr %s290, 4
        %s292 = scalar_lea.vmem %s1, %s291
        %p294 = scmp.eq.s32.totalorder %s28, 0
        // Predicated region
        $region41: #{tpu_custom_call.1} parent=35 // pred_check
          %p295 = pneg %p294
        $region42: #{tpu_custom_call.1} parent=35 // pred_check_branch
          %297 = sbr.rel (%p295) target = $region44
        $region43: #{tpu_custom_call.1} parent=35 // pred_region
          %v298 = vld [vmem:[%s285] sm:$0xff]
          %v299 = vpack.c.bf16 %v298, %v298
          %v300 = vld [vmem:[%s3] sm:$0xf]
          %v301 = vld [vmem:[%s3 + $0x4] sm:$0xf]
          %v302 = vld [vmem:[%s3 + $0x8] sm:$0xf]
          %v303 = vld [vmem:[%s3 + $0xc] sm:$0xf]
          %v308 = vunpack.c.l.b16 %v300
          %v309 = vunpack.c.l.b16 %v301
          %v310 = vunpack.c.l.b16 %v302
          %v311 = vunpack.c.l.b16 %v303
          %v312 = vpack.c.b16 %v309, %v308
          %v313 = vpack.c.b16 %v311, %v310
          %vm316 = vcmask 261120
          %v318 = vsel %vm316, %v299, 0
          %320 = vmatprep.subr.bf16.mxu0 0
          %321 = vmatpush1.bf16.msra.mxu0 %v312
          %322 = vmatprep.subr.bf16.mxu0 0
          %323 = vmatpush1.bf16.msra.mxu0 %v313
          %324 = vmatprep.subr.bf16.mxu0 0
          %325 = vmatpush1.bf16.msra.mxu0 0
          %326 = vmatprep.subr.bf16.mxu0 0
          %327 = vmatpush1.bf16.msra.mxu0 0
          %328 = vmatprep.subr.bf16.mxu0 0
          %329 = vmatpush1.bf16.msra.mxu0 0
          %330 = vmatprep.subr.bf16.mxu0 0
          %331 = vmatpush1.bf16.msra.mxu0 0
          %332 = vmatprep.subr.bf16.mxu0 0
          %333 = vmatpush1.bf16.msra.mxu0 0
          %334 = vmatprep.subr.bf16.mxu0 0
          %335 = vmatpush1.bf16.msra.mxu0 0
          %336 = vmatprep.subr.bf16.mxu0 0
          %337 = vmatpush1.bf16.msra.mxu0 0
          %338 = vmatprep.subr.bf16.mxu0 0
          %339 = vmatpush1.bf16.msra.mxu0 0
          %340 = vmatprep.subr.bf16.mxu0 0
          %341 = vmatpush1.bf16.msra.mxu0 0
          %342 = vmatprep.subr.bf16.mxu0 0
          %343 = vmatpush1.bf16.msra.mxu0 0
          %344 = vmatprep.subr.bf16.mxu0 0
          %345 = vmatpush1.bf16.msra.mxu0 0
          %346 = vmatprep.subr.bf16.mxu0 0
          %347 = vmatpush1.bf16.msra.mxu0 0
          %348 = vmatprep.subr.bf16.mxu0 0
          %349 = vmatpush1.bf16.msra.mxu0 0
          %350 = vmatprep.subr.bf16.mxu0 0
          %351 = vmatpush1.bf16.msra.mxu0 0
          %352 = vmatprep.mubr.bf16.mxu0 0
          %353 = vmatmul.mubr.bf16.gmra.mrb[0].mxu0 %v318
          %v354 = vpop.f32.mrb[0].mxu0
          %v355 = vadd.f32 0.0, %v354
          %v356 = vpop.f32.mrb[0].mxu0
          %v357 = vpop.f32.mrb[0].mxu0
          %v358 = vpop.f32.mrb[0].mxu0
          %359 = vdwg.mxu0
          %v360 = vpack.c.bf16 %v355, %v355
          %vm361 = vcmask 125952
          %362 = vst.msk [vmem:[#allocation2] sm:$0xf] %vm361, %v360
          %vm363 = vcmask 7168
          %364 = vst.msk [vmem:[#allocation3] sm:$0xff] %vm363, -inf
          %365 = vst.msk [vmem:[#allocation4] sm:$0xff] %vm363, 0.0
          %366 = vst.msk [vmem:[#allocation5] sm:$0xff] %vm316, 0.0
        $region44: #{tpu_custom_call.1} parent=35 // pred_fallthru
          _
        %v367 = vld [vmem:[#allocation2] sm:$0xf]
        %v368 = vld [vmem:[%s292] sm:$0xf]
        %vm369 = vcmask 130048
        %v371 = vsel %vm369, %v367, 0
        %v374 = vsel %vm369, %v368, 0
        %376 = vmatprep.subr.bf16.mxu0 0
        %377 = vmatpush1.bf16.xpose.msra.mxu0 %v374
        %378 = vmatprep.subr.bf16.mxu0 0
        %379 = vmatpush1.bf16.xpose.msra.mxu0 0
        %380 = vmatprep.subr.bf16.mxu0 0
        %381 = vmatpush1.bf16.xpose.msra.mxu0 0
        %382 = vmatprep.subr.bf16.mxu0 0
        %383 = vmatpush1.bf16.xpose.msra.mxu0 0
        %384 = vmatprep.subr.bf16.mxu0 0
        %385 = vmatpush1.bf16.xpose.msra.mxu0 0
        %386 = vmatprep.subr.bf16.mxu0 0
        %387 = vmatpush1.bf16.xpose.msra.mxu0 0
        %388 = vmatprep.subr.bf16.mxu0 0
        %389 = vmatpush1.bf16.xpose.msra.mxu0 0
        %390 = vmatprep.subr.bf16.mxu0 0
        %391 = vmatpush1.bf16.xpose.msra.mxu0 0
        %392 = vmatprep.subr.bf16.mxu0 0
        %393 = vmatpush1.bf16.xpose.msra.mxu0 0
        %394 = vmatprep.subr.bf16.mxu0 0
        %395 = vmatpush1.bf16.xpose.msra.mxu0 0
        %396 = vmatprep.subr.bf16.mxu0 0
        %397 = vmatpush1.bf16.xpose.msra.mxu0 0
        %398 = vmatprep.subr.bf16.mxu0 0
        %399 = vmatpush1.bf16.xpose.msra.mxu0 0
        %400 = vmatprep.subr.bf16.mxu0 0
        %401 = vmatpush1.bf16.xpose.msra.mxu0 0
        %402 = vmatprep.subr.bf16.mxu0 0
        %403 = vmatpush1.bf16.xpose.msra.mxu0 0
        %404 = vmatprep.subr.bf16.mxu0 0
        %405 = vmatpush1.bf16.xpose.msra.mxu0 0
        %406 = vmatprep.subr.bf16.mxu0 0
        %407 = vmatpush1.bf16.xpose.msra.mxu0 0
        %408 = vmatprep.mubr.bf16.mxu0 0
        %409 = vmatmul.mubr.bf16.gmra.mrb[0].mxu0 %v371
        %v410 = vpop.f32.mrb[0].mxu0
        %v411 = vadd.f32 0.0, %v410
        %v412 = vpop.f32.mrb[0].mxu0
        %v413 = vpop.f32.mrb[0].mxu0
        %v414 = vpop.f32.mrb[0].mxu0
        %415 = vdwg.mxu0
        %v416 = vld [vmem:[#allocation3] sm:$0xff]
        %vm417 = vcmask 64512
        %v418 = vsel %vm417, %v411, -inf
        %419 = vmax.xlane.f32.xlu0 %v418
        %v420 = vpop.xlane.xlu0 %419
        %v421 = vmax.f32 %v416, %v420
        %v422 = vsub.f32 %v416, %v421
        %v423 = vpow.pop %v422
        %425 = vset.pattern.permute.xlu0 0
        %426 = vperm.xlu0 %425, %v421
        %v427 = vpop.permute.xlu0 %426
        %v429 = vsub.f32 %v411, %v427
        %v430 = vpow.pop %v429
        %v431 = vld [vmem:[#allocation4] sm:$0xff]
        %v432 = vmul.f32 %v423, %v431
        %v433 = vsel %vm417, %v430, 0.0
        %434 = vadd.xlane.f32.xlu0 %v433
        %v435 = vpop.xlane.xlu0 %434
        %v436 = vadd.f32 %v432, %v435
        %vm437 = vcmask 7168
        %438 = vst.msk [vmem:[#allocation4] sm:$0xff] %vm437, %v436
        %v439 = vld [vmem:[#allocation5] sm:$0xff]
        %441 = vset.pattern.permute.xlu0 0
        %442 = vperm.xlu0 %441, %v423
        %v443 = vpop.permute.xlu0 %442
        %v445 = vmul.f32 %v443, %v439
        %v446 = vpack.c.bf16 %v430, %v430
        %v447 = vld [vmem:[%s240] sm:$0xf]
        %v449 = vsel %vm417, %v446, 0
        %vm451 = vcmask 1043456
        %v453 = vsel %vm451, %v447, 0
        %455 = vmatprep.subr.bf16.mxu0 0
        %456 = vmatpush1.bf16.msra.mxu0 %v453
        %457 = vmatprep.subr.bf16.mxu0 0
        %458 = vmatpush1.bf16.msra.mxu0 0
        %459 = vmatprep.subr.bf16.mxu0 0
        %460 = vmatpush1.bf16.msra.mxu0 0
        %461 = vmatprep.subr.bf16.mxu0 0
        %462 = vmatpush1.bf16.msra.mxu0 0
        %463 = vmatprep.subr.bf16.mxu0 0
        %464 = vmatpush1.bf16.msra.mxu0 0
        %465 = vmatprep.subr.bf16.mxu0 0
        %466 = vmatpush1.bf16.msra.mxu0 0
        %467 = vmatprep.subr.bf16.mxu0 0
        %468 = vmatpush1.bf16.msra.mxu0 0
        %469 = vmatprep.subr.bf16.mxu0 0
        %470 = vmatpush1.bf16.msra.mxu0 0
        %471 = vmatprep.subr.bf16.mxu0 0
        %472 = vmatpush1.bf16.msra.mxu0 0
        %473 = vmatprep.subr.bf16.mxu0 0
        %474 = vmatpush1.bf16.msra.mxu0 0
        %475 = vmatprep.subr.bf16.mxu0 0
        %476 = vmatpush1.bf16.msra.mxu0 0
        %477 = vmatprep.subr.bf16.mxu0 0
        %478 = vmatpush1.bf16.msra.mxu0 0
        %479 = vmatprep.subr.bf16.mxu0 0
        %480 = vmatpush1.bf16.msra.mxu0 0
        %481 = vmatprep.subr.bf16.mxu0 0
        %482 = vmatpush1.bf16.msra.mxu0 0
        %483 = vmatprep.subr.bf16.mxu0 0
        %484 = vmatpush1.bf16.msra.mxu0 0
        %485 = vmatprep.subr.bf16.mxu0 0
        %486 = vmatpush1.bf16.msra.mxu0 0
        %487 = vmatprep.mubr.bf16.mxu0 0
        %488 = vmatmul.mubr.bf16.gmra.mrb[0].mxu0 %v449
        %v489 = vpop.f32.mrb[0].mxu0
        %v490 = vadd.f32 0.0, %v489
        %v491 = vpop.f32.mrb[0].mxu0
        %v492 = vpop.f32.mrb[0].mxu0
        %v493 = vpop.f32.mrb[0].mxu0
        %494 = vdwg.mxu0
        %v495 = vadd.f32 %v445, %v490
        %vm496 = vcmask 261120
        %497 = vst.msk [vmem:[#allocation5] sm:$0xff] %vm496, %v495
        %498 = vst.msk [vmem:[#allocation3] sm:$0xff] %vm437, %v421
        // Predicated region
        $region45: #{tpu_custom_call.1} parent=35 // pred_check
          %p499 = pneg %p294
        $region46: #{tpu_custom_call.1} parent=35 // pred_check_branch
          %501 = sbr.rel (%p499) target = $region48
        $region47: #{tpu_custom_call.1} parent=35 // pred_region
          %v502 = vld [vmem:[#allocation4] sm:$0xff]
          %v503 = vrcp.pop %v502
          %v504 = vld [vmem:[#allocation5] sm:$0xff]
          %506 = vset.pattern.permute.xlu0 0
          %507 = vperm.xlu0 %506, %v503
          %v508 = vpop.permute.xlu0 %507
          %v510 = vmul.f32 %v504, %v508
          %511 = vst.msk [vmem:[%s278] sm:$0xff] %vm496, %v510
        $region48: #{tpu_custom_call.1} parent=35 // pred_fallthru
          _
        %s512 = sand.u32 %s155, 1
        %s513 = scalar_lea.sflag [#allocation8], %s512
        %s514 = sand.u32 %s155, 1
        %s515 = smul.addr %s514, 8
        %s516 = scalar_lea.vmem [#allocation9], %s515
        // Predicated region
        $region49: #{tpu_custom_call.1} parent=35 // pred_check
          %p517 = pneg %p165
        $region50: #{tpu_custom_call.1} parent=35 // pred_check_branch
          %519 = sbr.rel (%p517) target = $region52
        $region51: #{tpu_custom_call.1} parent=35 // pred_region
          %s521 = ssub.s32 128, 128
          %522 = vsyncadd %s513, %s521
          %s523 = sadd.s32 %s27, %s26
          %s524 = smul.addr %s523, 128
          %s525 = scalar_lea.hbm %s4, %s524
          %s527 = sshll.u32 %s516, 4
          %s528 = int_to_ptr.vmem [resolvable:$true] %s527
          %530 = dma.vmem_to_hbm [thread:$0]  %s528, 128, %s525, %s513
        $region52: #{tpu_custom_call.1} parent=35 // pred_fallthru
          _
      $region36: #{tpu_custom_call.1} parent=5 // pred_fallthru
        _
      %p531 = scmp.le.s32.totalorder 2, %s16
      // Predicated region
      $region53: #{tpu_custom_call.1} parent=5 // pred_check
        %p532 = pneg %p531
      $region54: #{tpu_custom_call.1} parent=5 // pred_check_branch
        %534 = sbr.rel (%p532) target = $region56
      $region55: #{tpu_custom_call.1} parent=5 // pred_region
        %s535 = ssub.s32 %s16, 2
        // Predicated region
        $region57: #{tpu_custom_call.1} parent=55 // pred_check
          %p536 = pneg %p171
        $region58: #{tpu_custom_call.1} parent=55 // pred_check_branch
          %538 = sbr.rel (%p536) target = $region60
        $region59: #{tpu_custom_call.1} parent=55 // pred_region
          %s539 = sand.u32 %s156, 1
          %s540 = scalar_lea.sflag [#allocation8], %s539
          %s541 = sand.u32 %s156, 1
          %s542 = smul.addr %s541, 8
          %s543 = scalar_lea.vmem [#allocation9], %s542
          %544 = dma.done %s540, 128
        $region60: #{tpu_custom_call.1} parent=55 // pred_fallthru
          _
      $region56: #{tpu_custom_call.1} parent=5 // pred_fallthru
        _
    $region6: #{tpu_custom_call.1} parent=1 // loop_footer
      %s20 = sadd.s32 1, %s16
    $region7: #{tpu_custom_call.1} parent=1 // loop_footer_branch
      %15 = sbr.rel target = $region3
    $region8: #{tpu_custom_call.1} parent=1 // loop_exit
      _
    %545 = vsyncpa [#allocation7], 1
    %s546 = scalar_lea.sflag [#allocation7], 1
    %547 = vsyncpa %s546, 1
    %548 = vsyncpa [#allocation8], 1
    %s549 = scalar_lea.sflag [#allocation8], 1
    %550 = vsyncpa %s549, 1

</llo_original>
